<compile_context>
chip_gen: v7x
topology: tpu7x:2x2x1
jax: 0.10.0
libtpu: 0.0.40
codegen_flags: <defaults>
</compile_context>

<pallas_src>
import jax
import jax.numpy as jnp
from jax import lax
from jax.experimental import pallas as pl
from jax.experimental.pallas import tpu as pltpu


# ----------------------------------------------------------------------------
# Primary: in-place stripe-only kernel
# ----------------------------------------------------------------------------
def _stripe_kernel(params_ref, x_hbm, o_hbm, tbuf, fbuf, sems):
    # params_ref : SMEM int32 (4*B,), [t_pos, t_len, f_pos, f_len] per batch
    # x_hbm/o_hbm: HBM refs (B, F, T); o_hbm is aliased to x_hbm
    # tbuf       : VMEM (F, TW)  -- time-stripe window
    # fbuf       : VMEM (FW, T)  -- freq-stripe window
    # sems       : DMA semaphores (2,)
    _, F, T = x_hbm.shape
    TW = tbuf.shape[1]
    FW = fbuf.shape[0]

    b = pl.program_id(0)
    tpos = params_ref[4 * b + 0]
    tlen = params_ref[4 * b + 1]
    fpos = params_ref[4 * b + 2]
    flen = params_ref[4 * b + 3]

    # Static-size windows, starts clamped into bounds.  The sampler guarantees
    # pos + len <= D and len < window size, so the true mask always lies inside
    # the (possibly shifted) window.
    t0 = jnp.maximum(jnp.minimum(tpos, T - TW), 0)
    f0 = jnp.maximum(jnp.minimum(fpos, F - FW), 0)

    # Kick off both window reads (they both see original x).
    tin = pltpu.make_async_copy(x_hbm.at[b, :, pl.ds(t0, TW)], tbuf, sems.at[0])
    fin = pltpu.make_async_copy(x_hbm.at[b, pl.ds(f0, FW), :], fbuf, sems.at[1])
    tin.start()
    fin.start()

    # Combined freq|time mask for each window, built from absolute indices.
    # Using the COMBINED mask in both windows makes their overlapping region
    # carry identical values, so the relative order of the two write-back DMAs
    # (and of fin vs. the time write-back) cannot change the result.
    col_t = t0 + lax.broadcasted_iota(jnp.int32, (1, TW), 1)
    row_t = lax.broadcasted_iota(jnp.int32, (F, 1), 0)
    mask_t = ((col_t >= tpos) & (col_t < tpos + tlen)) | \
             ((row_t >= fpos) & (row_t < fpos + flen))            # (F, TW)

    row_f = f0 + lax.broadcasted_iota(jnp.int32, (FW, 1), 0)
    col_f = lax.broadcasted_iota(jnp.int32, (1, T), 1)
    mask_f = ((row_f >= fpos) & (row_f < fpos + flen)) | \
             ((col_f >= tpos) & (col_f < tpos + tlen))            # (FW, T)

    zero = jnp.zeros((), dtype=tbuf.dtype)

    tin.wait()
    tbuf[...] = jnp.where(mask_t, zero, tbuf[...])
    tout = pltpu.make_async_copy(tbuf, o_hbm.at[b, :, pl.ds(t0, TW)], sems.at[0])
    tout.start()

    fin.wait()
    fbuf[...] = jnp.where(mask_f, zero, fbuf[...])
    fout = pltpu.make_async_copy(fbuf, o_hbm.at[b, pl.ds(f0, FW), :], sems.at[1])
    fout.start()

    # Drain before the next grid step reuses the scratch buffers.
    tout.wait()
    fout.wait()


def fbank_aug_stripes(x, params, freq_mask_width=(0, 8), time_mask_width=(0, 10)):
    """In-place stripe-only FbankAug: only the two masked windows touch HBM."""
    B, F, T = x.shape
    TW = int(min(time_mask_width[1], T))
    FW = int(min(freq_mask_width[1], F))
    return pl.pallas_call(
        _stripe_kernel,
        out_shape=jax.ShapeDtypeStruct((B, F, T), x.dtype),
        grid_spec=pltpu.PrefetchScalarGridSpec(
            num_scalar_prefetch=1,
            grid=(B,),
            in_specs=[pl.BlockSpec(memory_space=pl.ANY)],
            out_specs=pl.BlockSpec(memory_space=pl.ANY),
            scratch_shapes=[
                pltpu.VMEM((F, TW), x.dtype),
                pltpu.VMEM((FW, T), x.dtype),
                pltpu.SemaphoreType.DMA((2,)),
            ],
        ),
        # Flat input index 1 == x (index 0 is the scalar-prefetch params array).
        input_output_aliases={1: 0},
        compiler_params=pltpu.CompilerParams(
            dimension_semantics=("arbitrary",),
        ),
    )(params, x)


# ----------------------------------------------------------------------------
# Fallback: out-of-place streaming kernel
# ----------------------------------------------------------------------------
def _streaming_kernel(params_ref, x_ref, o_ref):
    bblk, F, Tt = x_ref.shape
    B_total = params_ref.shape[0] // 4
    bi = pl.program_id(0)
    ti = pl.program_id(1)
    t0 = ti * Tt

    t_idx = t0 + lax.broadcasted_iota(jnp.int32, (1, Tt), 1)    # (1, Tt)
    f_idx = lax.broadcasted_iota(jnp.int32, (F, 1), 0)          # (F, 1)
    zero = jnp.zeros((), dtype=o_ref.dtype)

    def body(j, carry):
        # Clamp for the padded tail block (cdiv batch blocking); out-of-range
        # rows are discarded on write-back anyway.
        b = jnp.minimum(bi * bblk + j, B_total - 1)
        tpos = params_ref[4 * b + 0]
        tlen = params_ref[4 * b + 1]
        fpos = params_ref[4 * b + 2]
        flen = params_ref[4 * b + 3]
        mask = ((t_idx >= tpos) & (t_idx < tpos + tlen)) | \
               ((f_idx >= fpos) & (f_idx < fpos + flen))         # (F, Tt)
        o_ref[j] = jnp.where(mask, zero, x_ref[j])
        return carry

    lax.fori_loop(0, bblk, body, None, unroll=True)


def _vmem_budget_bytes():
    """Per-core VMEM budget (bytes), generation-aware when the query works."""
    try:
        cap = int(pltpu.get_tpu_info().vmem_capacity_bytes)
    except Exception:
        cap = 64 << 20            # conservative default (v7x physical per-TC VMEM)
    return (3 * cap) // 4         # headroom for Mosaic internal scratch


def _choose_tiling(B, F, T, itemsize):
    """(batch_block, time_tile, vmem_limit): lane-dense blocks of ~budget/8
    bytes, >= ~8 grid steps where possible; VMEM limit derived from the actual
    block size (in + out, double-buffered => 4 resident blocks)."""
    budget = _vmem_budget_bytes()
    target = max(1 << 20, budget // 8)
    row_bytes = F * itemsize
    plane_bytes = T * row_bytes

    if plane_bytes <= target:
        # Whole time axis fits: pack batch elements (capped at 8 for the
        # unrolled per-batch loop) but keep enough grid steps for megacore
        # sharding + DMA/compute overlap.
        t_tile = T
        b_blk = int(max(1, min(8, B, target // max(1, plane_bytes))))
        b_blk = int(min(b_blk, max(1, B // 8)))
    else:
        # Tile time in multiples of 128 (lane-dense, unmasked stores).
        b_blk = 1
        t_tile = int(max(128, (target // max(1, row_bytes * 128)) * 128))
        t_tile = int(min(t_tile, T))

    block_bytes = b_blk * F * t_tile * itemsize
    vmem_limit = int(min(max(32 << 20, 4 * block_bytes + (4 << 20)), budget))
    return b_blk, t_tile, vmem_limit


def fbank_aug_streaming(x, params):
    """Out-of-place FbankAug: streams the whole tensor through VMEM."""
    # TODO(synk): for T < 128 a flat (B, F*T) view would keep stores lane-dense.
    B, F, T = x.shape
    b_blk, t_tile, vmem_limit = _choose_tiling(B, F, T, x.dtype.itemsize)
    grid = (pl.cdiv(B, b_blk), pl.cdiv(T, t_tile))
    block = (b_blk, F, t_tile)
    idx_map = lambda bi, ti, params: (bi, 0, ti)
    return pl.pallas_call(
        _streaming_kernel,
        out_shape=jax.ShapeDtypeStruct((B, F, T), x.dtype),
        grid_spec=pltpu.PrefetchScalarGridSpec(
            num_scalar_prefetch=1,
            grid=grid,
            in_specs=[pl.BlockSpec(block, idx_map)],
            out_specs=pl.BlockSpec(block, idx_map),
        ),
        compiler_params=pltpu.CompilerParams(
            dimension_semantics=("parallel", "parallel"),
            vmem_limit_bytes=vmem_limit,
        ),
    )(params, x)


# ----------------------------------------------------------------------------
# Dispatcher + glue
# ----------------------------------------------------------------------------
_STRIPE_SUPPORT_CACHE = {}


def _stripe_path_ok(x, params, freq_mask_width, time_mask_width):
    """Feature-detect the stripe kernel once per shape/dtype (compile + run +
    numeric check vs the pure-JAX reference).  Any failure => streaming path.
    Requires concrete (eager) inputs on first use; under tracing it degrades
    gracefully to the streaming kernel."""
    key = (tuple(x.shape), jnp.dtype(x.dtype).name,
           tuple(freq_mask_width), tuple(time_mask_width))
    ok = _STRIPE_SUPPORT_CACHE.get(key)
    if ok is None:
        try:
            out = jax.block_until_ready(
                fbank_aug_stripes(x, params, freq_mask_width, time_mask_width))
            ok = bool(jnp.array_equal(out, fbank_aug_ref(x, params)))
        except Exception:
            ok = False
        _STRIPE_SUPPORT_CACHE[key] = ok
    return ok


def fbank_aug(x, params, freq_mask_width=(0, 8), time_mask_width=(0, 10),
              use_inplace=True):
    """FbankAug forward.  x: (B, F, T); params: flat (4*B,) int32
    [t_pos, t_len, f_pos, f_len] per batch.  Prefers the in-place stripe
    kernel (10-100x less HBM traffic; donate x under jit for the full win),
    falls back to the streaming kernel."""
    if use_inplace and _stripe_path_ok(x, params, freq_mask_width, time_mask_width):
        return fbank_aug_stripes(x, params, freq_mask_width, time_mask_width)
    return fbank_aug_streaming(x, params)


def sample_mask_params(key, B, F, T,
                       freq_mask_width=(0, 8), time_mask_width=(0, 10)):
    """Reproduces torch.randint sampling of FbankAug (plain-JAX glue).
    Returns flat int32 (4*B,) laid out [t_pos, t_len, f_pos, f_len] per batch."""
    k_tl, k_tp, k_fl, k_fp = jax.random.split(key, 4)

    t_len = jax.random.randint(k_tl, (B,), time_mask_width[0], time_mask_width[1])
    t_high = jnp.maximum(1, T - jnp.max(t_len))
    t_pos = jax.random.randint(k_tp, (B,), 0, t_high)

    f_len = jax.random.randint(k_fl, (B,), freq_mask_width[0], freq_mask_width[1])
    f_high = jnp.maximum(1, F - jnp.max(f_len))
    f_pos = jax.random.randint(k_fp, (B,), 0, f_high)

    return jnp.stack([t_pos, t_len, f_pos, f_len], axis=1).reshape(-1).astype(jnp.int32)


def fbank_aug_ref(x, params):
    """Pure-JAX reference of the PyTorch forward, for verification."""
    B, F, T = x.shape
    p = params.reshape(B, 4)
    tpos = p[:, 0][:, None, None]
    tlen = p[:, 1][:, None, None]
    fpos = p[:, 2][:, None, None]
    flen = p[:, 3][:, None, None]
    t_idx = jnp.arange(T)[None, None, :]
    f_idx = jnp.arange(F)[None, :, None]
    tmask = (t_idx >= tpos) & (t_idx < tpos + tlen)
    fmask = (f_idx >= fpos) & (f_idx < fpos + flen)
    return jnp.where(tmask | fmask, 0.0, x)


if __name__ == "__main__":
    key = jax.random.PRNGKey(0)
    k_x, k_m = jax.random.split(key)

    B, F, T = 2, 24, 200            # (batch, mel bins, time frames)
    x = jax.random.normal(k_x, (B, F, T), dtype=jnp.float32)
    params = sample_mask_params(k_m, B, F, T)

    ref = fbank_aug_ref(x, params)

    # Fallback streaming kernel (always available).
    out_stream = jax.block_until_ready(fbank_aug_streaming(x, params))
    assert out_stream.shape == x.shape and out_stream.dtype == x.dtype
    assert jnp.array_equal(out_stream, ref), "streaming kernel mismatch vs reference"

    # Dispatcher: in-place stripe kernel where supported, else streaming.
    out = jax.block_until_ready(fbank_aug(x, params))
    assert out.shape == x.shape and out.dtype == x.dtype
    assert jnp.array_equal(out, ref), "fbank_aug output mismatch vs reference"

    print("KERNEL_OK")
</pallas_src>

<mosaic_0001>
module attributes {stable_mosaic.version = 11 : i64} {
  func.func @_streaming_kernel(%arg0: i32, %arg1: i32, %arg2: memref<8xi32, #tpu.memory_space<smem>>, %arg3: memref<1x24x200xf32, #tpu.memory_space<vmem>>, %arg4: memref<1x24x200xf32, #tpu.memory_space<vmem>>) attributes {dimension_semantics = [#tpu.dimension_semantics<parallel>, #tpu.dimension_semantics<parallel>], iteration_bounds = array<i64: 2, 1>, scalar_prefetch = 1 : i64, scratch_operands = 0 : i64, tpu.core_type = #tpu.core_type<tc>, window_params = [{transform_indices = @transform_0, window_bounds = array<i64: 1, 24, 200>}, {transform_indices = @transform_1, window_bounds = array<i64: 1, 24, 200>}]} {
    %c200_i32 = arith.constant 200 : i32
    %0 = arith.muli %arg1, %c200_i32 : i32
    %1 = tpu.iota {dimensions = array<i32: 1>} : vector<1x200xi32>
    %2 = vector.broadcast %0 : i32 to vector<1x200xi32>
    %3 = arith.addi %2, %1 : vector<1x200xi32>
    %4 = tpu.iota {dimensions = array<i32: 0>} : vector<24x1xi32>
    %cst = arith.constant 0.000000e+00 : f32
    %c0_i32 = arith.constant 0 : i32
    %c1_i32 = arith.constant 1 : i32
    %5 = arith.muli %arg0, %c1_i32 : i32
    %6 = arith.addi %5, %c0_i32 : i32
    %c1_i32_0 = arith.constant 1 : i32
    %7 = arith.minsi %6, %c1_i32_0 : i32
    %c4_i32 = arith.constant 4 : i32
    %8 = arith.muli %c4_i32, %7 : i32
    %c0_i32_1 = arith.constant 0 : i32
    %9 = arith.addi %8, %c0_i32_1 : i32
    %10 = arith.index_cast %9 : i32 to index
    %11 = memref.load %arg2[%10] : memref<8xi32, #tpu.memory_space<smem>>
    %c4_i32_2 = arith.constant 4 : i32
    %12 = arith.muli %c4_i32_2, %7 : i32
    %c1_i32_3 = arith.constant 1 : i32
    %13 = arith.addi %12, %c1_i32_3 : i32
    %14 = arith.index_cast %13 : i32 to index
    %15 = memref.load %arg2[%14] : memref<8xi32, #tpu.memory_space<smem>>
    %c4_i32_4 = arith.constant 4 : i32
    %16 = arith.muli %c4_i32_4, %7 : i32
    %c2_i32 = arith.constant 2 : i32
    %17 = arith.addi %16, %c2_i32 : i32
    %18 = arith.index_cast %17 : i32 to index
    %19 = memref.load %arg2[%18] : memref<8xi32, #tpu.memory_space<smem>>
    %c4_i32_5 = arith.constant 4 : i32
    %20 = arith.muli %c4_i32_5, %7 : i32
    %c3_i32 = arith.constant 3 : i32
    %21 = arith.addi %20, %c3_i32 : i32
    %22 = arith.index_cast %21 : i32 to index
    %23 = memref.load %arg2[%22] : memref<8xi32, #tpu.memory_space<smem>>
    %24 = vector.broadcast %11 : i32 to vector<1x200xi32>
    %25 = arith.cmpi sge, %3, %24 : vector<1x200xi32>
    %26 = arith.addi %11, %15 : i32
    %27 = vector.broadcast %26 : i32 to vector<1x200xi32>
    %28 = arith.cmpi slt, %3, %27 : vector<1x200xi32>
    %29 = arith.andi %25, %28 : vector<1x200xi1>
    %30 = vector.broadcast %19 : i32 to vector<24x1xi32>
    %31 = arith.cmpi sge, %4, %30 : vector<24x1xi32>
    %32 = arith.addi %19, %23 : i32
    %33 = vector.broadcast %32 : i32 to vector<24x1xi32>
    %34 = arith.cmpi slt, %4, %33 : vector<24x1xi32>
    %35 = arith.andi %31, %34 : vector<24x1xi1>
    %36 = vector.broadcast %29 : vector<1x200xi1> to vector<24x200xi1>
    %37 = vector.broadcast %35 : vector<24x1xi1> to vector<24x200xi1>
    %38 = arith.ori %36, %37 : vector<24x200xi1>
    %39 = arith.index_cast %c0_i32 : i32 to index
    %c0 = arith.constant 0 : index
    %c0_6 = arith.constant 0 : index
    %40 = vector.load %arg3[%39, %c0, %c0_6] : memref<1x24x200xf32, #tpu.memory_space<vmem>>, vector<1x24x200xf32>
    %41 = vector.shape_cast %40 : vector<1x24x200xf32> to vector<24x200xf32>
    %42 = vector.broadcast %cst : f32 to vector<24x200xf32>
    %43 = arith.select %38, %42, %41 : vector<24x200xi1>, vector<24x200xf32>
    %44 = arith.index_cast %c0_i32 : i32 to index
    %c0_7 = arith.constant 0 : index
    %c0_8 = arith.constant 0 : index
    %45 = vector.load %arg4[%44, %c0_7, %c0_8] : memref<1x24x200xf32, #tpu.memory_space<vmem>>, vector<1x24x200xf32>
    %46 = vector.shape_cast %45 : vector<1x24x200xf32> to vector<24x200xf32>
    %47 = vector.shape_cast %43 : vector<24x200xf32> to vector<1x24x200xf32>
    tpu.vector_store %arg4[%44, %c0_7, %c0_8], %47 {strides = array<i32>} : memref<1x24x200xf32, #tpu.memory_space<vmem>>, vector<1x24x200xf32>,
    %c1_i32_9 = arith.constant 1 : i32
    return
  }
  func.func @transform_0(%arg0: i32, %arg1: i32, %arg2: memref<8xi32, #tpu.memory_space<smem>>) -> (i32, i32, i32) {
    %c0_i32 = arith.constant 0 : i32
    %c0_i32_0 = arith.constant 0 : i32
    return %arg0, %c0_i32, %arg1 : i32, i32, i32
  }
  func.func @transform_1(%arg0: i32, %arg1: i32, %arg2: memref<8xi32, #tpu.memory_space<smem>>) -> (i32, i32, i32) {
    %c0_i32 = arith.constant 0 : i32
    %c0_i32_0 = arith.constant 0 : i32
    return %arg0, %c0_i32, %arg1 : i32, i32, i32
  }
}

</mosaic_0001>

<llo_original>
// kernel: tpu_custom_call.1
$region0: #{tpu_custom_call.1}
  #allocation0 [shape = 'u32[]', space=smem, size = 0x4, offset = 0x4, fixed_abs, tag = 'smem constant byte address 0x4 - core index']
  #allocation1 [shape = 'u32[144,128]{1,0:T(1,128)}', space=vmem, size = 0x12000, scoped, tag = 'internal scratch']
  #allocation2 [shape = 's32[1]{0}', space=sflag, size = 0x4, scoped, tag = 'scoped memory for tpu_custom_call.1']
  #allocation3 [shape = 'u8[512]{0}', space=smem, size = 0x200, scoped, tag = 'prefetched SMEM operand 0']
  %s0 = inlined_call_operand.hbm [shape: s32[8], index: 0, kind: input, shape index: {}]
  %s1 = inlined_call_operand.hbm [shape: f32[2,24,200], index: 1, kind: input, shape index: {}]
  %s2 = inlined_call_operand.hbm [shape: f32[2,24,200], index: 2, kind: output, shape index: {}]
  %s3 = sld [smem:[#allocation0]]
  $region41: #{tpu_custom_call.1} parent=0
    _
  %s5 = ssub.s32 1, %s3
  %s6 = scalar_select 0, %s5, %s3
  %8 = dma.hbm_to_smem %s0, 16, [#allocation3], [#allocation2]
  %9 = dma.done [#allocation2], 16
  %10 = sfence
  $region1: #{tpu_custom_call.1} parent=0
    #allocation4 [shape = 'u8[49152]{0}', space=vmem, size = 0xc000, scoped, tag = 'input window, operand 1']
    #allocation5 [shape = 's32[2]{0}', space=sflag, size = 0x8, scoped, tag = 'scoped memory for tpu_custom_call.1']
    #allocation6 [shape = 's32[2]{0}', space=sflag, size = 0x8, scoped, tag = 'scoped memory for tpu_custom_call.1']
    #allocation7 [shape = 'u8[49152]{0}', space=vmem, size = 0xc000, scoped, tag = 'output window, operand 0']
    %11 = vsyncpa [#allocation5], 0
    %s12 = scalar_lea.sflag [#allocation5], 1
    %13 = vsyncpa %s12, 0
    %14 = vsyncpa [#allocation6], 0
    %s15 = scalar_lea.sflag [#allocation6], 1
    %16 = vsyncpa %s15, 0
    loop: start=0, step=1, limit=4
    $region2: #{tpu_custom_call.1} parent=1 // loop_pre_header
      _
    $region3: #{tpu_custom_call.1} parent=1 // loop_header
      %s18 = sphi 0, %s22
      %p19 = scmp.ge.s32.totalorder %s18, 4
      %s25 = sphi 0, %s37
      %s26 = sphi 0, %s33
      %s27 = sphi 0, %s25
      %s28 = sphi 0, %s26
      %s29 = sphi 0, %s27
      %s30 = sphi 0, %s28
      %s42 = sphi 0, %s44
      %s45 = sphi 0, %s42
      %s46 = sphi 0, %s45
      %s62 = sphi 0, %s46
      %s70 = sphi 0, %s72
      %s73 = sphi 0, %s70
      %s74 = sphi 0, %s73
      %s90 = sphi 0, %s74
    $region4: #{tpu_custom_call.1} parent=1 // loop_header_branch
      %21 = sbr.rel (%p19) target = $region8
    $region5: #{tpu_custom_call.1} parent=1 // loop_body
      %s23 = ssub.s32 %s18, 1
      %s24 = ssub.s32 %s18, 2
      %s31 = sadd.s32 1, %s26
      %p32 = scmp.ge.s32.totalorder %s31, 1
      %s33 = scalar_select %p32, 0, %s31
      %s34 = sadd.s32 1, %s25
      %s35 = scalar_select %p32, %s34, %s25
      %p36 = scmp.ge.s32.totalorder %s35, 2
      %s37 = scalar_select %p36, 0, %s35
      %s38 = ssub.s32 %s25, %s37
      %s39 = ssub.s32 %s26, %s33
      %s40 = sor.u32 %s38, %s39
      %p41 = scmp.eq.s32.totalorder %s40, 0
      %s43 = sadd.s32 %s42, 1
      %s44 = scalar_select %p41, %s42, %s43
      %p47 = pneg %p41
      %p48 = scmp.eq.s32.totalorder %s18, 1
      %p49 = por %p47, %p48
      %p50 = scmp.ne.s32.totalorder %s42, %s45
      %p51 = scmp.eq.s32.totalorder %s18, 0
      %p52 = por %p50, %p51
      %p53 = scmp.ne.s32.totalorder %s42, %s45
      %p54 = scmp.eq.s32.totalorder %s23, 1
      %p55 = por %p53, %p54
      %p56 = scmp.ne.s32.totalorder %s45, %s46
      %p57 = scmp.eq.s32.totalorder %s23, 0
      %p58 = por %p56, %p57
      %p59 = scmp.ne.s32.totalorder %s45, %s46
      %p60 = scmp.eq.s32.totalorder %s24, 1
      %p61 = por %p59, %p60
      %p63 = scmp.ne.s32.totalorder %s46, %s62
      %p64 = scmp.eq.s32.totalorder %s24, 0
      %p65 = por %p63, %p64
      %s66 = ssub.s32 %s25, %s37
      %s67 = ssub.s32 %s26, %s33
      %s68 = sor.u32 %s66, %s67
      %p69 = scmp.eq.s32.totalorder %s68, 0
      %s71 = sadd.s32 %s70, 1
      %s72 = scalar_select %p69, %s70, %s71
      %p75 = pneg %p69
      %p76 = scmp.eq.s32.totalorder %s18, 1
      %p77 = por %p75, %p76
      %p78 = scmp.ne.s32.totalorder %s70, %s73
      %p79 = scmp.eq.s32.totalorder %s18, 0
      %p80 = por %p78, %p79
      %p81 = scmp.ne.s32.totalorder %s70, %s73
      %p82 = scmp.eq.s32.totalorder %s23, 1
      %p83 = por %p81, %p82
      %p84 = scmp.ne.s32.totalorder %s73, %s74
      %p85 = scmp.eq.s32.totalorder %s23, 0
      %p86 = por %p84, %p85
      %p87 = scmp.ne.s32.totalorder %s73, %s74
      %p88 = scmp.eq.s32.totalorder %s24, 1
      %p89 = por %p87, %p88
      %p91 = scmp.ne.s32.totalorder %s74, %s90
      %p92 = scmp.eq.s32.totalorder %s24, 0
      %p93 = por %p91, %p92
      %p94 = scmp.le.s32.totalorder 1, %s18
      %p95 = scmp.lt.s32.totalorder %s18, 3
      %p96 = pnand %p94, %p95
      %p97 = pneg %p96
      // Predicated region
      $region9: #{tpu_custom_call.1} parent=5 // pred_check
        _
      $region10: #{tpu_custom_call.1} parent=5 // pred_check_branch
        %99 = sbr.rel (%p96) target = $region12
      $region11: #{tpu_custom_call.1} parent=5 // pred_region
        %s100 = ssub.s32 %s18, 1
      $region12: #{tpu_custom_call.1} parent=5 // pred_fallthru
        _
      %p101 = scmp.lt.s32.totalorder %s18, 2
      // Predicated region
      $region13: #{tpu_custom_call.1} parent=5 // pred_check
        %p102 = pneg %p101
      $region14: #{tpu_custom_call.1} parent=5 // pred_check_branch
        %104 = sbr.rel (%p102) target = $region16
      $region15: #{tpu_custom_call.1} parent=5 // pred_region
        // Predicated region
        $region17: #{tpu_custom_call.1} parent=15 // pred_check
          %p105 = pneg %p52
        $region18: #{tpu_custom_call.1} parent=15 // pred_check_branch
          %107 = sbr.rel (%p105) target = $region20
        $region19: #{tpu_custom_call.1} parent=15 // pred_region
          %s108 = sand.u32 %s42, 1
          %s109 = scalar_lea.sflag [#allocation5], %s108
          %s110 = sand.u32 %s42, 1
          %s111 = smul.addr %s110, 48
          %s112 = scalar_lea.vmem [#allocation4], %s111
          %s113 = smul.u32 2, %s26
          %s115 = ssub.s32 768, 768
          %116 = vsyncadd %s109, %s115
          %s117 = smul.addr %s25, 6
          %s118 = sadd.s32 %s113, %s117
          %s119 = smul.addr %s118, 128
          %s120 = scalar_lea.hbm %s1, %s119
          %s121 = sshll.u32 %s112, 4
          %s122 = int_to_ptr.vmem [resolvable:$true] %s121
          %127 = dma.hbm_to_vmem [thread:$0]  %s120, 768, %s122, %s109, 256, 256, 16
        $region20: #{tpu_custom_call.1} parent=15 // pred_fallthru
          _
      $region16: #{tpu_custom_call.1} parent=5 // pred_fallthru
        _
      %p128 = scmp.le.s32.totalorder 1, %s18
      %p129 = scmp.lt.s32.totalorder %s18, 3
      %p130 = pnand %p128, %p129
      %p131 = pneg %p130
      // Predicated region
      $region21: #{tpu_custom_call.1} parent=5 // pred_check
        _
      $region22: #{tpu_custom_call.1} parent=5 // pred_check_branch
        %133 = sbr.rel (%p130) target = $region24
      $region23: #{tpu_custom_call.1} parent=5 // pred_region
        %s134 = ssub.s32 %s18, 1
        %s135 = sand.u32 %s45, 1
        %s136 = scalar_lea.sflag [#allocation5], %s135
        %s137 = sand.u32 %s45, 1
        %s138 = smul.addr %s137, 48
        %s139 = scalar_lea.vmem [#allocation4], %s138
        // Predicated region
        $region25: #{tpu_custom_call.1} parent=23 // pred_check
          %p140 = pneg %p58
        $region26: #{tpu_custom_call.1} parent=23 // pred_check_branch
          %142 = sbr.rel (%p140) target = $region28
        $region27: #{tpu_custom_call.1} parent=23 // pred_region
          %143 = dma.done %s136, 768
        $region28: #{tpu_custom_call.1} parent=23 // pred_fallthru
          _
        %s144 = sand.u32 %s45, 1
        %s145 = scalar_lea.sflag [#allocation5], %s144
        %s146 = sand.u32 %s45, 1
        %s147 = smul.addr %s146, 48
        %s148 = scalar_lea.vmem [#allocation4], %s147
        %p149 = pneg %p58
        %p150 = pneg %p55
        %p151 = pneg %p86
        %p152 = pneg %p83
        %s153 = sand.u32 %s73, 1
        %s154 = scalar_lea.sflag [#allocation6], %s153
        %s155 = sand.u32 %s73, 1
        %s156 = smul.addr %s155, 48
        %s157 = scalar_lea.vmem [#allocation7], %s156
        %s158 = smul.u32 2, %s28
        %s159 = smul.u32 2, %s28
        %s160 = smul.u32 %s28, 200
        %v161 = vlaneseq
        %v162 = vand.u32 %v161, 127
        %v163 = vadd.s32 %v162, 128
        %v164 = vstv %s160
        %v165 = vadd.s32 %v164, %v162
        %v166 = vadd.s32 %v164, %v163
        %v167 = vlaneseq
        %v168 = vshrl.u32 %v167, 7
        %v169 = vadd.s32 %v168, 8
        %v170 = vadd.s32 %v168, 16
        %p171 = scmp.lt.s32.totalorder %s27, 1
        %s172 = scalar_select %p171, %s27, 1
        %s173 = smul.u32 %s172, 4
        %s174 = sld [smem:[#allocation3 + %s173]]
        %s175 = sadd.s32 %s173, 1
        %s176 = sld [smem:[#allocation3 + %s175]]
        %s177 = sadd.s32 %s173, 2
        %s178 = sld [smem:[#allocation3 + %s177]]
        %s179 = sadd.s32 %s173, 3
        %s180 = sld [smem:[#allocation3 + %s179]]
        %v181 = vstv %s174
        %vm182 = vcmp.ge.s32.totalorder %v165, %v181
        %vm183 = vcmp.ge.s32.totalorder %v166, %v181
        %s184 = sadd.s32 %s174, %s176
        %v185 = vstv %s184
        %vm186 = vcmp.lt.s32.totalorder %v165, %v185
        %vm187 = vcmp.lt.s32.totalorder %v166, %v185
        %vm188 = vmand %vm182, %vm186
        %vm189 = vmand %vm183, %vm187
        %v190 = vstv %s178
        %vm191 = vcmp.ge.s32.totalorder %v168, %v190
        %vm192 = vcmp.ge.s32.totalorder %v169, %v190
        %vm193 = vcmp.ge.s32.totalorder %v170, %v190
        %s194 = sadd.s32 %s178, %s180
        %v195 = vstv %s194
        %vm196 = vcmp.lt.s32.totalorder %v168, %v195
        %vm197 = vcmp.lt.s32.totalorder %v169, %v195
        %vm198 = vcmp.lt.s32.totalorder %v170, %v195
        %vm199 = vmand %vm191, %vm196
        %vm200 = vmand %vm192, %vm197
        %vm201 = vmand %vm193, %vm198
        %v202 = vsel %vm188, 1, 0
        %v203 = vsel %vm189, 1, 0
        %vm204 = vcmp.eq.s32.totalorder %v202, 1
        %vm205 = vcmp.eq.s32.totalorder %v203, 1
        %v206 = vsel %vm199, 1, 0
        %v207 = vsel %vm200, 1, 0
        %v208 = vsel %vm201, 1, 0
        %vm209 = vcmp.eq.s32.totalorder %v206, 1
        %vm210 = vcmp.eq.s32.totalorder %v207, 1
        %vm211 = vcmp.eq.s32.totalorder %v208, 1
        %vm212 = vmor %vm204, %vm209
        %vm213 = vmor %vm205, %vm209
        %vm214 = vmor %vm204, %vm210
        %vm215 = vmor %vm205, %vm210
        %vm216 = vmor %vm204, %vm211
        %vm217 = vmor %vm205, %vm211
        %v218 = vld [vmem:[%s139] sm:$0xff]
        %v219 = vld [vmem:[%s139 + $0x8] sm:$0xff]
        %v220 = vld [vmem:[%s139 + $0x10] sm:$0xff]
        %v221 = vld [vmem:[%s139 + $0x18] sm:$0xff]
        %v222 = vld [vmem:[%s139 + $0x20] sm:$0xff]
        %v223 = vld [vmem:[%s139 + $0x28] sm:$0xff]
        %v224 = vsel %vm212, 0.0, %v218
        %v225 = vsel %vm213, 0.0, %v219
        %v226 = vsel %vm214, 0.0, %v220
        %v227 = vsel %vm215, 0.0, %v221
        %v228 = vsel %vm216, 0.0, %v222
        %v229 = vsel %vm217, 0.0, %v223
        %230 = vst [vmem:[%s157] sm:$0xff] %v224
        %vm231 = vcmask 588800
        %232 = vst.msk [vmem:[%s157 + $0x8] sm:$0xff] %vm231, %v225
        %233 = vst [vmem:[%s157 + $0x10] sm:$0xff] %v226
        %234 = vst.msk [vmem:[%s157 + $0x18] sm:$0xff] %vm231, %v227
        %235 = vst [vmem:[%s157 + $0x20] sm:$0xff] %v228
        %236 = vst.msk [vmem:[%s157 + $0x28] sm:$0xff] %vm231, %v229
        %s237 = sand.u32 %s73, 1
        %s238 = scalar_lea.sflag [#allocation6], %s237
        %s239 = sand.u32 %s73, 1
        %s240 = smul.addr %s239, 48
        %s241 = scalar_lea.vmem [#allocation7], %s240
        // Predicated region
        $region29: #{tpu_custom_call.1} parent=23 // pred_check
          %p242 = pneg %p83
        $region30: #{tpu_custom_call.1} parent=23 // pred_check_branch
          %244 = sbr.rel (%p242) target = $region32
        $region31: #{tpu_custom_call.1} parent=23 // pred_region
          %s245 = smul.u32 2, %s28
          %s247 = ssub.s32 768, 768
          %248 = vsyncadd %s238, %s247
          %s249 = smul.addr %s27, 6
          %s250 = sadd.s32 %s245, %s249
          %s251 = smul.addr %s250, 128
          %s252 = scalar_lea.hbm %s2, %s251
          %s253 = sshll.u32 %s241, 4
          %s254 = int_to_ptr.vmem [resolvable:$true] %s253
          %259 = dma.vmem_to_hbm [thread:$0]  %s254, 768, %s252, %s238, 256, 256, 16
        $region32: #{tpu_custom_call.1} parent=23 // pred_fallthru
          _
      $region24: #{tpu_custom_call.1} parent=5 // pred_fallthru
        _
      %p260 = scmp.le.s32.totalorder 2, %s18
      // Predicated region
      $region33: #{tpu_custom_call.1} parent=5 // pred_check
        %p261 = pneg %p260
      $region34: #{tpu_custom_call.1} parent=5 // pred_check_branch
        %263 = sbr.rel (%p261) target = $region36
      $region35: #{tpu_custom_call.1} parent=5 // pred_region
        %s264 = ssub.s32 %s18, 2
        // Predicated region
        $region37: #{tpu_custom_call.1} parent=35 // pred_check
          %p265 = pneg %p89
        $region38: #{tpu_custom_call.1} parent=35 // pred_check_branch
          %267 = sbr.rel (%p265) target = $region40
        $region39: #{tpu_custom_call.1} parent=35 // pred_region
          %s268 = sand.u32 %s74, 1
          %s269 = scalar_lea.sflag [#allocation6], %s268
          %s270 = sand.u32 %s74, 1
          %s271 = smul.addr %s270, 48
          %s272 = scalar_lea.vmem [#allocation7], %s271
          %273 = dma.done %s269, 768
        $region40: #{tpu_custom_call.1} parent=35 // pred_fallthru
          _
      $region36: #{tpu_custom_call.1} parent=5 // pred_fallthru
        _
    $region6: #{tpu_custom_call.1} parent=1 // loop_footer
      %s22 = sadd.s32 1, %s18
    $region7: #{tpu_custom_call.1} parent=1 // loop_footer_branch
      %17 = sbr.rel target = $region3
    $region8: #{tpu_custom_call.1} parent=1 // loop_exit
      _
    %274 = vsyncpa [#allocation5], 1
    %s275 = scalar_lea.sflag [#allocation5], 1
    %276 = vsyncpa %s275, 1
    %277 = vsyncpa [#allocation6], 1
    %s278 = scalar_lea.sflag [#allocation6], 1
    %279 = vsyncpa %s278, 1

</llo_original>
